<compile_context>
chip_gen: v5e
topology: v5e:2x2
jax: 0.10.0
libtpu: 0.0.40
codegen_flags: <defaults>
</compile_context>

<pallas_src>
import functools

import jax
import jax.numpy as jnp
from jax.experimental import pallas as pl
from jax.experimental.pallas import tpu as pltpu

LANES = 128


def _fold_rows(a, acc_rows):
    """Fold a (TPr, 128) tile into an (acc_rows, 128) accumulator with pure VALU adds."""
    r = a.shape[0]
    if r == acc_rows:
        return a
    # (TPr,128) -> (TPr/acc_rows, acc_rows, 128) is a free, vreg-aligned reshape.
    return a.reshape(r // acc_rows, acc_rows, a.shape[1]).sum(axis=0)


def _ce2d_kernel(w_ref, x_ref, t_ref, loss_ref, cnt_ref, *,
                 num_classes, rows, tpr, acc_rows, masked):
    j = pl.program_id(1)

    @pl.when(j == 0)
    def _init():
        loss_ref[...] = jnp.zeros_like(loss_ref)
        cnt_ref[...] = jnp.zeros_like(cnt_ref)

    t = t_ref[0]                                           # (TPr, 128) int32 labels
    if masked:
        # Ragged last row-tile: rows >= `rows` must contribute exactly 0.  Only the
        # targets and the per-pixel contribution are masked; garbage logits in invalid
        # rows may produce NaN/Inf but the final select discards the untaken lane.
        row = jax.lax.broadcasted_iota(jnp.int32, t.shape, 0)
        valid = (j * tpr + row) < rows
        t = jnp.where(valid, t, -1)                        # no class matches -1

    # Pass 1: per-pixel running max over the class planes (full-vreg VALU).
    m = x_ref[0, 0].astype(jnp.float32)
    for c in range(1, num_classes):
        m = jnp.maximum(m, x_ref[0, c].astype(jnp.float32))

    # Pass 2: exp-sum, picked logit / picked weight, per-class pixel counts.
    s = jnp.zeros_like(m)
    px = jnp.zeros_like(m)     # x[target]   per pixel
    pw = jnp.zeros_like(m)     # weight[target] per pixel
    for c in range(num_classes):
        xc = x_ref[0, c].astype(jnp.float32)
        s = s + jnp.exp(xc - m)
        hit = t == c
        px = jnp.where(hit, xc, px)
        pw = jnp.where(hit, w_ref[c], pw)                  # scalar from SMEM
        cnt_ref[0, c] += _fold_rows(hit.astype(jnp.int32), acc_rows)

    lse = jnp.log(s) + m                                   # log-sum-exp per pixel
    contrib = pw * (lse - px)                              # weight[t] * (lse - x[t])
    if masked:
        contrib = jnp.where(valid, contrib, 0.0)           # contain NaN/Inf of OOB rows
    loss_ref[0] += _fold_rows(contrib, acc_rows)


def _vmem_budget_bytes():
    """(usable buffer budget, pallas vmem limit) sized per TPU generation."""
    cap = 64 * 1024 * 1024                                  # conservative default (v7x)
    try:
        info = pltpu.get_tpu_info()
        cap = int(getattr(info, "vmem_capacity_bytes", cap)) or cap
    except Exception:
        pass
    # Keep real headroom below physical capacity; cap the scoped limit at 100 MiB.
    limit = max(32 * 1024 * 1024, min(cap - 16 * 1024 * 1024, 100 * 1024 * 1024))
    budget = limit - 8 * 1024 * 1024                        # slack for compiler scratch
    return budget, limit


def cross_entropy_loss_2d(logits, target, weight, *, max_rows_per_tile=None):
    """Returns (loss, number_of_pixels_per_class, divisor_weighted_pixel_sum).

    Targets are assumed to lie in [0, C) (same as the reference module in practice).
    """
    N, C, H, W = logits.shape
    HW = H * W
    L = LANES

    # View the pixel axis as (rows, 128) lanes.  Free reshape when HW is a lane multiple.
    # TODO(synk): for HW % 128 != 0 this takes one wrapper-side pad copy; padded targets
    #             are -1 so padded pixels contribute exactly 0 to loss and counts.
    x3 = logits.reshape(N, C, HW)
    t2 = target.reshape(N, HW).astype(jnp.int32)
    if HW % L != 0:
        pad = L - HW % L
        x3 = jnp.pad(x3, ((0, 0), (0, 0), (0, pad)))
        t2 = jnp.pad(t2, ((0, 0), (0, pad)), constant_values=-1)
    rows = x3.shape[-1] // L
    x4 = x3.reshape(N, C, rows, L)
    t3 = t2.reshape(N, rows, L)
    w_f32 = jnp.asarray(weight, dtype=jnp.float32).reshape(C)

    # ---- tile size from REAL (padded) VMEM usage -----------------------------------
    # per 128-pixel row: double-buffered logits block + double-buffered int32 targets
    # block + ~10 live f32 row-temps (m, s, px, pw, xc, exp, hit, contrib, ...).
    x_isz = x4.dtype.itemsize
    row_bytes = 2 * C * L * x_isz + 2 * L * 4 + 10 * L * 4
    fixed_bytes = 8 * L * 4 + C * 8 * L * 4 + (1 << 20)     # resident outputs + slack
    budget, vmem_limit = _vmem_budget_bytes()
    rows_cap = max(8, (budget - fixed_bytes) // row_bytes)
    if max_rows_per_tile is not None:
        rows_cap = min(rows_cap, max_rows_per_tile)

    sub_q = max(8, 32 // x_isz)          # sublane quantum: 8 (f32), 16 (bf16), 32 (int8)
    if rows <= rows_cap:
        tpr = rows                       # single row tile (full dim is always legal)
    else:
        tpr = max(sub_q, (rows_cap // sub_q) * sub_q)
    num_j = pl.cdiv(rows, tpr)
    masked = (rows % tpr) != 0
    acc_rows = 8 if tpr % 8 == 0 else tpr

    kernel = functools.partial(
        _ce2d_kernel, num_classes=C, rows=rows, tpr=tpr,
        acc_rows=acc_rows, masked=masked)

    loss_parts, cnt_parts = pl.pallas_call(
        kernel,
        out_shape=(
            jax.ShapeDtypeStruct((N, acc_rows, L), jnp.float32),   # per-batch loss partials
            jax.ShapeDtypeStruct((N, C, acc_rows, L), jnp.int32),  # per-batch count partials
        ),
        grid_spec=pltpu.PrefetchScalarGridSpec(
            num_scalar_prefetch=0,
            grid=(N, num_j),
            in_specs=[
                pl.BlockSpec(memory_space=pltpu.MemorySpace.SMEM),        # class weights
                pl.BlockSpec((1, C, tpr, L), lambda n, j: (n, 0, j, 0)),  # logits planes
                pl.BlockSpec((1, tpr, L), lambda n, j: (n, j, 0)),        # targets
            ],
            out_specs=[
                pl.BlockSpec((1, acc_rows, L), lambda n, j: (n, 0, 0)),
                pl.BlockSpec((1, C, acc_rows, L), lambda n, j: (n, 0, 0, 0)),
            ],
        ),
        compiler_params=pltpu.CompilerParams(
            dimension_semantics=("parallel", "arbitrary"),
            vmem_limit_bytes=int(vmem_limit),
        ),
    )(w_f32, x4, t3)

    # Tiny scalar epilogue: combine per-batch / per-lane partials.
    counts = jnp.sum(cnt_parts, axis=(0, 2, 3))                           # (C,) int32
    divisor = jnp.maximum(jnp.sum(counts.astype(jnp.float32) * w_f32), 1e-5)
    loss = jnp.sum(loss_parts) / divisor
    return loss, counts, divisor


def _reference(logits, target, weight):
    C = logits.shape[1]
    w = jnp.asarray(weight, jnp.float32)
    logp = jax.nn.log_softmax(logits.astype(jnp.float32), axis=1)
    t = target.astype(jnp.int32)
    picked = jnp.take_along_axis(logp, t[:, None], axis=1)[:, 0]          # (N, H, W)
    per_pixel = -w[t] * picked
    counts = jnp.bincount(t.reshape(-1), length=C)
    divisor = jnp.maximum(jnp.sum(counts * w), 1e-5)
    loss = jnp.sum(per_pixel) / divisor
    return loss, counts, divisor


def _check(out, logits, target, weight, rtol=1e-5, atol=1e-5):
    loss, counts, divisor = out
    ref_loss, ref_counts, ref_div = _reference(logits, target, weight)
    assert jnp.allclose(loss, ref_loss, rtol=rtol, atol=atol), (loss, ref_loss)
    assert jnp.array_equal(counts, ref_counts.astype(jnp.int32)), (counts, ref_counts)
    assert jnp.allclose(divisor, ref_div, rtol=1e-5, atol=1e-5), (divisor, ref_div)


if __name__ == "__main__":
    key = jax.random.PRNGKey(0)
    k1, k2, k3, k4 = jax.random.split(key, 4)
    weight = [0.2, 1.0, 0.5, 2.0]

    # Case 1: HW a lane multiple, single row tile per batch element.
    N, C, H, W = 2, 4, 16, 16
    logits = jax.random.normal(k1, (N, C, H, W), dtype=jnp.float32)
    target = jax.random.randint(k2, (N, H, W), 0, C, dtype=jnp.int32)
    out = cross_entropy_loss_2d(logits, target, weight)
    jax.block_until_ready(out)
    _check(out, logits, target, weight)

    # Case 2: HW not a lane multiple (exercises the pad path, padded targets = -1).
    H2 = W2 = 12
    logits2 = jax.random.normal(k3, (N, C, H2, W2), dtype=jnp.float32)
    target2 = jax.random.randint(k4, (N, H2, W2), 0, C, dtype=jnp.int32)
    out2 = cross_entropy_loss_2d(logits2, target2, weight)
    jax.block_until_ready(out2)
    _check(out2, logits2, target2, weight)

    # Case 3: bf16 logits, multiple row tiles with a ragged last tile (forced small tile
    # to exercise the accumulator init / ragged-row masking / pipelined grid path).
    H3, W3 = 48, 48                      # HW = 2304 -> 18 rows of 128 pixels
    logits3 = jax.random.normal(k1, (1, C, H3, W3), dtype=jnp.bfloat16)
    target3 = jax.random.randint(k2, (1, H3, W3), 0, C, dtype=jnp.int32)
    out3 = cross_entropy_loss_2d(logits3, target3, weight, max_rows_per_tile=16)
    jax.block_until_ready(out3)
    _check(out3, logits3, target3, weight, rtol=2e-3, atol=2e-3)

    print("KERNEL_OK")
</pallas_src>

<mosaic_0001>
module attributes {stable_mosaic.version = 11 : i64} {
  func.func @_ce2d_kernel(%arg0: i32, %arg1: i32, %arg2: memref<4xf32, #tpu.memory_space<smem>>, %arg3: memref<1x4x2x128xf32, #tpu.memory_space<vmem>>, %arg4: memref<1x2x128xi32, #tpu.memory_space<vmem>>, %arg5: memref<1x2x128xf32, #tpu.memory_space<vmem>>, %arg6: memref<1x4x2x128xi32, #tpu.memory_space<vmem>>) attributes {dimension_semantics = [#tpu.dimension_semantics<parallel>, #tpu.dimension_semantics<arbitrary>], iteration_bounds = array<i64: 2, 1>, scalar_prefetch = 0 : i64, scratch_operands = 0 : i64, tpu.core_type = #tpu.core_type<tc>, window_params = [{transform_indices = @transform_0, window_bounds = array<i64: 4>}, {transform_indices = @transform_1, window_bounds = array<i64: 1, 4, 2, 128>}, {transform_indices = @transform_2, window_bounds = array<i64: 1, 2, 128>}, {transform_indices = @transform_3, window_bounds = array<i64: 1, 2, 128>}, {transform_indices = @transform_4, window_bounds = array<i64: 1, 4, 2, 128>}]} {
    %c0_i32 = arith.constant 0 : i32
    %0 = arith.cmpi eq, %arg1, %c0_i32 : i32
    %1 = arith.extui %0 : i1 to i32
    %c0_i32_0 = arith.constant 0 : i32
    %2 = arith.cmpi ne, %1, %c0_i32_0 : i32
    scf.if %2 {
      %cst_77 = arith.constant 0.000000e+00 : f32
      %101 = vector.broadcast %cst_77 : f32 to vector<1x2x128xf32>
      %c0_78 = arith.constant 0 : index
      %c0_79 = arith.constant 0 : index
      %c0_80 = arith.constant 0 : index
      %102 = vector.load %arg5[%c0_78, %c0_79, %c0_80] : memref<1x2x128xf32, #tpu.memory_space<vmem>>, vector<1x2x128xf32>
      tpu.vector_store %arg5[%c0_78, %c0_79, %c0_80], %101 {strides = array<i32>} : memref<1x2x128xf32, #tpu.memory_space<vmem>>, vector<1x2x128xf32>,
      %c0_i32_81 = arith.constant 0 : i32
      %103 = vector.broadcast %c0_i32_81 : i32 to vector<1x4x2x128xi32>
      %c0_82 = arith.constant 0 : index
      %c0_83 = arith.constant 0 : index
      %c0_84 = arith.constant 0 : index
      %c0_85 = arith.constant 0 : index
      %104 = vector.load %arg6[%c0_82, %c0_83, %c0_84, %c0_85] : memref<1x4x2x128xi32, #tpu.memory_space<vmem>>, vector<1x4x2x128xi32>
      tpu.vector_store %arg6[%c0_82, %c0_83, %c0_84, %c0_85], %103 {strides = array<i32>} : memref<1x4x2x128xi32, #tpu.memory_space<vmem>>, vector<1x4x2x128xi32>,
    } else {
    }
    %c0 = arith.constant 0 : index
    %c0_1 = arith.constant 0 : index
    %c0_2 = arith.constant 0 : index
    %3 = vector.load %arg4[%c0, %c0_1, %c0_2] : memref<1x2x128xi32, #tpu.memory_space<vmem>>, vector<1x2x128xi32>
    %4 = vector.shape_cast %3 : vector<1x2x128xi32> to vector<2x128xi32>
    %c0_3 = arith.constant 0 : index
    %c0_4 = arith.constant 0 : index
    %c0_5 = arith.constant 0 : index
    %c0_6 = arith.constant 0 : index
    %5 = vector.load %arg3[%c0_3, %c0_4, %c0_5, %c0_6] : memref<1x4x2x128xf32, #tpu.memory_space<vmem>>, vector<1x1x2x128xf32>
    %6 = vector.shape_cast %5 : vector<1x1x2x128xf32> to vector<2x128xf32>
    %c0_7 = arith.constant 0 : index
    %c1 = arith.constant 1 : index
    %c0_8 = arith.constant 0 : index
    %c0_9 = arith.constant 0 : index
    %7 = vector.load %arg3[%c0_7, %c1, %c0_8, %c0_9] : memref<1x4x2x128xf32, #tpu.memory_space<vmem>>, vector<1x1x2x128xf32>
    %8 = vector.shape_cast %7 : vector<1x1x2x128xf32> to vector<2x128xf32>
    %9 = arith.maximumf %6, %8 : vector<2x128xf32>
    %c0_10 = arith.constant 0 : index
    %c2 = arith.constant 2 : index
    %c0_11 = arith.constant 0 : index
    %c0_12 = arith.constant 0 : index
    %10 = vector.load %arg3[%c0_10, %c2, %c0_11, %c0_12] : memref<1x4x2x128xf32, #tpu.memory_space<vmem>>, vector<1x1x2x128xf32>
    %11 = vector.shape_cast %10 : vector<1x1x2x128xf32> to vector<2x128xf32>
    %12 = arith.maximumf %9, %11 : vector<2x128xf32>
    %c0_13 = arith.constant 0 : index
    %c3 = arith.constant 3 : index
    %c0_14 = arith.constant 0 : index
    %c0_15 = arith.constant 0 : index
    %13 = vector.load %arg3[%c0_13, %c3, %c0_14, %c0_15] : memref<1x4x2x128xf32, #tpu.memory_space<vmem>>, vector<1x1x2x128xf32>
    %14 = vector.shape_cast %13 : vector<1x1x2x128xf32> to vector<2x128xf32>
    %15 = arith.maximumf %12, %14 : vector<2x128xf32>
    %cst = arith.constant 0.000000e+00 : f32
    %16 = vector.broadcast %cst : f32 to vector<2x128xf32>
    %cst_16 = arith.constant 0.000000e+00 : f32
    %17 = vector.broadcast %cst_16 : f32 to vector<2x128xf32>
    %cst_17 = arith.constant 0.000000e+00 : f32
    %18 = vector.broadcast %cst_17 : f32 to vector<2x128xf32>
    %c0_18 = arith.constant 0 : index
    %c0_19 = arith.constant 0 : index
    %c0_20 = arith.constant 0 : index
    %c0_21 = arith.constant 0 : index
    %19 = vector.load %arg3[%c0_18, %c0_19, %c0_20, %c0_21] : memref<1x4x2x128xf32, #tpu.memory_space<vmem>>, vector<1x1x2x128xf32>
    %20 = vector.shape_cast %19 : vector<1x1x2x128xf32> to vector<2x128xf32>
    %21 = arith.subf %20, %15 : vector<2x128xf32>
    %22 = math.exp %21 : vector<2x128xf32>
    %23 = arith.addf %16, %22 : vector<2x128xf32>
    %c0_i32_22 = arith.constant 0 : i32
    %24 = vector.broadcast %c0_i32_22 : i32 to vector<2x128xi32>
    %25 = arith.cmpi eq, %4, %24 : vector<2x128xi32>
    %26 = arith.select %25, %20, %17 : vector<2x128xi1>, vector<2x128xf32>
    %c0_23 = arith.constant 0 : index
    %27 = memref.load %arg2[%c0_23] : memref<4xf32, #tpu.memory_space<smem>>
    %28 = vector.broadcast %27 : f32 to vector<2x128xf32>
    %29 = arith.select %25, %28, %18 : vector<2x128xi1>, vector<2x128xf32>
    %c0_24 = arith.constant 0 : index
    %c0_25 = arith.constant 0 : index
    %c0_26 = arith.constant 0 : index
    %c0_27 = arith.constant 0 : index
    %30 = vector.load %arg6[%c0_24, %c0_25, %c0_26, %c0_27] : memref<1x4x2x128xi32, #tpu.memory_space<vmem>>, vector<1x1x2x128xi32>
    %31 = vector.shape_cast %30 : vector<1x1x2x128xi32> to vector<2x128xi32>
    %32 = arith.extui %25 : vector<2x128xi1> to vector<2x128xi32>
    %33 = arith.addi %31, %32 : vector<2x128xi32>
    %c0_28 = arith.constant 0 : index
    %c0_29 = arith.constant 0 : index
    %c0_30 = arith.constant 0 : index
    %c0_31 = arith.constant 0 : index
    %34 = vector.load %arg6[%c0_28, %c0_29, %c0_30, %c0_31] : memref<1x4x2x128xi32, #tpu.memory_space<vmem>>, vector<1x1x2x128xi32>
    %35 = vector.shape_cast %34 : vector<1x1x2x128xi32> to vector<2x128xi32>
    %36 = vector.shape_cast %33 : vector<2x128xi32> to vector<1x1x2x128xi32>
    tpu.vector_store %arg6[%c0_28, %c0_29, %c0_30, %c0_31], %36 {strides = array<i32>} : memref<1x4x2x128xi32, #tpu.memory_space<vmem>>, vector<1x1x2x128xi32>,
    %c0_32 = arith.constant 0 : index
    %c1_33 = arith.constant 1 : index
    %c0_34 = arith.constant 0 : index
    %c0_35 = arith.constant 0 : index
    %37 = vector.load %arg3[%c0_32, %c1_33, %c0_34, %c0_35] : memref<1x4x2x128xf32, #tpu.memory_space<vmem>>, vector<1x1x2x128xf32>
    %38 = vector.shape_cast %37 : vector<1x1x2x128xf32> to vector<2x128xf32>
    %39 = arith.subf %38, %15 : vector<2x128xf32>
    %40 = math.exp %39 : vector<2x128xf32>
    %41 = arith.addf %23, %40 : vector<2x128xf32>
    %c1_i32 = arith.constant 1 : i32
    %42 = vector.broadcast %c1_i32 : i32 to vector<2x128xi32>
    %43 = arith.cmpi eq, %4, %42 : vector<2x128xi32>
    %44 = arith.select %43, %38, %26 : vector<2x128xi1>, vector<2x128xf32>
    %c1_36 = arith.constant 1 : index
    %45 = memref.load %arg2[%c1_36] : memref<4xf32, #tpu.memory_space<smem>>
    %46 = vector.broadcast %45 : f32 to vector<2x128xf32>
    %47 = arith.select %43, %46, %29 : vector<2x128xi1>, vector<2x128xf32>
    %c0_37 = arith.constant 0 : index
    %c1_38 = arith.constant 1 : index
    %c0_39 = arith.constant 0 : index
    %c0_40 = arith.constant 0 : index
    %48 = vector.load %arg6[%c0_37, %c1_38, %c0_39, %c0_40] : memref<1x4x2x128xi32, #tpu.memory_space<vmem>>, vector<1x1x2x128xi32>
    %49 = vector.shape_cast %48 : vector<1x1x2x128xi32> to vector<2x128xi32>
    %50 = arith.extui %43 : vector<2x128xi1> to vector<2x128xi32>
    %51 = arith.addi %49, %50 : vector<2x128xi32>
    %c0_41 = arith.constant 0 : index
    %c1_42 = arith.constant 1 : index
    %c0_43 = arith.constant 0 : index
    %c0_44 = arith.constant 0 : index
    %52 = vector.load %arg6[%c0_41, %c1_42, %c0_43, %c0_44] : memref<1x4x2x128xi32, #tpu.memory_space<vmem>>, vector<1x1x2x128xi32>
    %53 = vector.shape_cast %52 : vector<1x1x2x128xi32> to vector<2x128xi32>
    %54 = vector.shape_cast %51 : vector<2x128xi32> to vector<1x1x2x128xi32>
    tpu.vector_store %arg6[%c0_41, %c1_42, %c0_43, %c0_44], %54 {strides = array<i32>} : memref<1x4x2x128xi32, #tpu.memory_space<vmem>>, vector<1x1x2x128xi32>,
    %c0_45 = arith.constant 0 : index
    %c2_46 = arith.constant 2 : index
    %c0_47 = arith.constant 0 : index
    %c0_48 = arith.constant 0 : index
    %55 = vector.load %arg3[%c0_45, %c2_46, %c0_47, %c0_48] : memref<1x4x2x128xf32, #tpu.memory_space<vmem>>, vector<1x1x2x128xf32>
    %56 = vector.shape_cast %55 : vector<1x1x2x128xf32> to vector<2x128xf32>
    %57 = arith.subf %56, %15 : vector<2x128xf32>
    %58 = math.exp %57 : vector<2x128xf32>
    %59 = arith.addf %41, %58 : vector<2x128xf32>
    %c2_i32 = arith.constant 2 : i32
    %60 = vector.broadcast %c2_i32 : i32 to vector<2x128xi32>
    %61 = arith.cmpi eq, %4, %60 : vector<2x128xi32>
    %62 = arith.select %61, %56, %44 : vector<2x128xi1>, vector<2x128xf32>
    %c2_49 = arith.constant 2 : index
    %63 = memref.load %arg2[%c2_49] : memref<4xf32, #tpu.memory_space<smem>>
    %64 = vector.broadcast %63 : f32 to vector<2x128xf32>
    %65 = arith.select %61, %64, %47 : vector<2x128xi1>, vector<2x128xf32>
    %c0_50 = arith.constant 0 : index
    %c2_51 = arith.constant 2 : index
    %c0_52 = arith.constant 0 : index
    %c0_53 = arith.constant 0 : index
    %66 = vector.load %arg6[%c0_50, %c2_51, %c0_52, %c0_53] : memref<1x4x2x128xi32, #tpu.memory_space<vmem>>, vector<1x1x2x128xi32>
    %67 = vector.shape_cast %66 : vector<1x1x2x128xi32> to vector<2x128xi32>
    %68 = arith.extui %61 : vector<2x128xi1> to vector<2x128xi32>
    %69 = arith.addi %67, %68 : vector<2x128xi32>
    %c0_54 = arith.constant 0 : index
    %c2_55 = arith.constant 2 : index
    %c0_56 = arith.constant 0 : index
    %c0_57 = arith.constant 0 : index
    %70 = vector.load %arg6[%c0_54, %c2_55, %c0_56, %c0_57] : memref<1x4x2x128xi32, #tpu.memory_space<vmem>>, vector<1x1x2x128xi32>
    %71 = vector.shape_cast %70 : vector<1x1x2x128xi32> to vector<2x128xi32>
    %72 = vector.shape_cast %69 : vector<2x128xi32> to vector<1x1x2x128xi32>
    tpu.vector_store %arg6[%c0_54, %c2_55, %c0_56, %c0_57], %72 {strides = array<i32>} : memref<1x4x2x128xi32, #tpu.memory_space<vmem>>, vector<1x1x2x128xi32>,
    %c0_58 = arith.constant 0 : index
    %c3_59 = arith.constant 3 : index
    %c0_60 = arith.constant 0 : index
    %c0_61 = arith.constant 0 : index
    %73 = vector.load %arg3[%c0_58, %c3_59, %c0_60, %c0_61] : memref<1x4x2x128xf32, #tpu.memory_space<vmem>>, vector<1x1x2x128xf32>
    %74 = vector.shape_cast %73 : vector<1x1x2x128xf32> to vector<2x128xf32>
    %75 = arith.subf %74, %15 : vector<2x128xf32>
    %76 = math.exp %75 : vector<2x128xf32>
    %77 = arith.addf %59, %76 : vector<2x128xf32>
    %c3_i32 = arith.constant 3 : i32
    %78 = vector.broadcast %c3_i32 : i32 to vector<2x128xi32>
    %79 = arith.cmpi eq, %4, %78 : vector<2x128xi32>
    %80 = arith.select %79, %74, %62 : vector<2x128xi1>, vector<2x128xf32>
    %c3_62 = arith.constant 3 : index
    %81 = memref.load %arg2[%c3_62] : memref<4xf32, #tpu.memory_space<smem>>
    %82 = vector.broadcast %81 : f32 to vector<2x128xf32>
    %83 = arith.select %79, %82, %65 : vector<2x128xi1>, vector<2x128xf32>
    %c0_63 = arith.constant 0 : index
    %c3_64 = arith.constant 3 : index
    %c0_65 = arith.constant 0 : index
    %c0_66 = arith.constant 0 : index
    %84 = vector.load %arg6[%c0_63, %c3_64, %c0_65, %c0_66] : memref<1x4x2x128xi32, #tpu.memory_space<vmem>>, vector<1x1x2x128xi32>
    %85 = vector.shape_cast %84 : vector<1x1x2x128xi32> to vector<2x128xi32>
    %86 = arith.extui %79 : vector<2x128xi1> to vector<2x128xi32>
    %87 = arith.addi %85, %86 : vector<2x128xi32>
    %c0_67 = arith.constant 0 : index
    %c3_68 = arith.constant 3 : index
    %c0_69 = arith.constant 0 : index
    %c0_70 = arith.constant 0 : index
    %88 = vector.load %arg6[%c0_67, %c3_68, %c0_69, %c0_70] : memref<1x4x2x128xi32, #tpu.memory_space<vmem>>, vector<1x1x2x128xi32>
    %89 = vector.shape_cast %88 : vector<1x1x2x128xi32> to vector<2x128xi32>
    %90 = vector.shape_cast %87 : vector<2x128xi32> to vector<1x1x2x128xi32>
    tpu.vector_store %arg6[%c0_67, %c3_68, %c0_69, %c0_70], %90 {strides = array<i32>} : memref<1x4x2x128xi32, #tpu.memory_space<vmem>>, vector<1x1x2x128xi32>,
    %91 = math.log %77 : vector<2x128xf32>
    %92 = arith.addf %91, %15 : vector<2x128xf32>
    %93 = arith.subf %92, %80 : vector<2x128xf32>
    %94 = arith.mulf %83, %93 : vector<2x128xf32>
    %c0_71 = arith.constant 0 : index
    %c0_72 = arith.constant 0 : index
    %c0_73 = arith.constant 0 : index
    %95 = vector.load %arg5[%c0_71, %c0_72, %c0_73] : memref<1x2x128xf32, #tpu.memory_space<vmem>>, vector<1x2x128xf32>
    %96 = vector.shape_cast %95 : vector<1x2x128xf32> to vector<2x128xf32>
    %97 = arith.addf %96, %94 : vector<2x128xf32>
    %c0_74 = arith.constant 0 : index
    %c0_75 = arith.constant 0 : index
    %c0_76 = arith.constant 0 : index
    %98 = vector.load %arg5[%c0_74, %c0_75, %c0_76] : memref<1x2x128xf32, #tpu.memory_space<vmem>>, vector<1x2x128xf32>
    %99 = vector.shape_cast %98 : vector<1x2x128xf32> to vector<2x128xf32>
    %100 = vector.shape_cast %97 : vector<2x128xf32> to vector<1x2x128xf32>
    tpu.vector_store %arg5[%c0_74, %c0_75, %c0_76], %100 {strides = array<i32>} : memref<1x2x128xf32, #tpu.memory_space<vmem>>, vector<1x2x128xf32>,
    return
  }
  func.func @transform_0(%arg0: i32, %arg1: i32) -> i32 {
    %c0_i32 = arith.constant 0 : i32
    %c0_i32_0 = arith.constant 0 : i32
    return %c0_i32 : i32
  }
  func.func @transform_1(%arg0: i32, %arg1: i32) -> (i32, i32, i32, i32) {
    %c0_i32 = arith.constant 0 : i32
    %c0_i32_0 = arith.constant 0 : i32
    %c0_i32_1 = arith.constant 0 : i32
    return %arg0, %c0_i32, %arg1, %c0_i32_0 : i32, i32, i32, i32
  }
  func.func @transform_2(%arg0: i32, %arg1: i32) -> (i32, i32, i32) {
    %c0_i32 = arith.constant 0 : i32
    %c0_i32_0 = arith.constant 0 : i32
    return %arg0, %arg1, %c0_i32 : i32, i32, i32
  }
  func.func @transform_3(%arg0: i32, %arg1: i32) -> (i32, i32, i32) {
    %c0_i32 = arith.constant 0 : i32
    %c0_i32_0 = arith.constant 0 : i32
    %c0_i32_1 = arith.constant 0 : i32
    return %arg0, %c0_i32, %c0_i32_0 : i32, i32, i32
  }
  func.func @transform_4(%arg0: i32, %arg1: i32) -> (i32, i32, i32, i32) {
    %c0_i32 = arith.constant 0 : i32
    %c0_i32_0 = arith.constant 0 : i32
    %c0_i32_1 = arith.constant 0 : i32
    %c0_i32_2 = arith.constant 0 : i32
    return %arg0, %c0_i32, %c0_i32_0, %c0_i32_1 : i32, i32, i32, i32
  }
}

</mosaic_0001>

<llo_original>
// kernel: tpu_custom_call.1
$region0: #{tpu_custom_call.1}
  #allocation0 [shape = 'u32[]', space=smem, size = 0x4, offset = 0x4, fixed_abs, tag = 'smem constant byte address 0x4 - core index']
  #allocation1 [shape = 'u32[72,128]{1,0:T(1,128)}', space=vmem, size = 0x9000, scoped, tag = 'internal scratch']
  %s0 = inlined_call_operand.hbm [shape: f32[4], index: 0, kind: input, shape index: {}]
  %s1 = inlined_call_operand.hbm [shape: f32[2,4,2,128], index: 1, kind: input, shape index: {}]
  %s2 = inlined_call_operand.hbm [shape: s32[2,2,128], index: 2, kind: input, shape index: {}]
  %s3 = inlined_call_operand.hbm [shape: f32[2,2,128], index: 3, kind: output, shape index: {0}]
  %s4 = inlined_call_operand.hbm [shape: s32[2,4,2,128], index: 4, kind: output, shape index: {1}]
  %5 = xla_tuple %s3, %s4
  %s6 = sld [smem:[#allocation0]]
  $region69: #{tpu_custom_call.1} parent=0
    _
  %s8 = ssub.s32 1, %s6
  %s9 = scalar_select 0, %s8, %s6
  $region1: #{tpu_custom_call.1} parent=0
    #allocation2 [shape = 'u8[512]{0}', space=smem, size = 0x200, scoped, tag = 'input window, operand 0, single buffered']
    #allocation3 [shape = 's32[2]{0}', space=sflag, size = 0x8, scoped, tag = 'scoped memory for tpu_custom_call.1']
    #allocation4 [shape = 's32[2]{0}', space=sflag, size = 0x8, scoped, tag = 'scoped memory for tpu_custom_call.1']
    #allocation5 [shape = 's32[2]{0}', space=sflag, size = 0x8, scoped, tag = 'scoped memory for tpu_custom_call.1']
    #allocation6 [shape = 'u8[8192]{0}', space=vmem, size = 0x2000, scoped, tag = 'input window, operand 1']
    #allocation7 [shape = 'u8[2048]{0}', space=vmem, size = 0x800, scoped, tag = 'input window, operand 2']
    #allocation8 [shape = 's32[2]{0}', space=sflag, size = 0x8, scoped, tag = 'scoped memory for tpu_custom_call.1']
    #allocation9 [shape = 'u8[2048]{0}', space=vmem, size = 0x800, scoped, tag = 'output window, operand 0']
    #allocation10 [shape = 'u8[8192]{0}', space=vmem, size = 0x2000, scoped, tag = 'output window, operand 1']
    #allocation11 [shape = 's32[2]{0}', space=sflag, size = 0x8, scoped, tag = 'scoped memory for tpu_custom_call.1']
    %10 = vsyncpa [#allocation5], 0
    %11 = vsyncpa [#allocation3], 0
    %s12 = scalar_lea.sflag [#allocation3], 1
    %13 = vsyncpa %s12, 0
    %14 = vsyncpa [#allocation8], 0
    %s15 = scalar_lea.sflag [#allocation8], 1
    %16 = vsyncpa %s15, 0
    %17 = vsyncpa [#allocation4], 0
    %s18 = scalar_lea.sflag [#allocation4], 1
    %19 = vsyncpa %s18, 0
    %20 = vsyncpa [#allocation11], 0
    %s21 = scalar_lea.sflag [#allocation11], 1
    %22 = vsyncpa %s21, 0
    loop: start=0, step=1, limit=4
    $region2: #{tpu_custom_call.1} parent=1 // loop_pre_header
      _
    $region3: #{tpu_custom_call.1} parent=1 // loop_header
      %s24 = sphi 0, %s28
      %p25 = scmp.ge.s32.totalorder %s24, 4
      %s31 = sphi 0, %s43
      %s32 = sphi 0, %s39
      %s33 = sphi 0, %s31
      %s34 = sphi 0, %s32
      %s35 = sphi 0, %s33
      %s36 = sphi 0, %s34
      %s44 = sphi 0, %s44
      %s46 = sphi 0, %s44
      %s47 = sphi 0, %s46
      %s61 = sphi 0, %s47
      %s69 = sphi 0, %s71
      %s72 = sphi 0, %s69
      %s73 = sphi 0, %s72
      %s89 = sphi 0, %s73
      %s97 = sphi 0, %s99
      %s100 = sphi 0, %s97
      %s101 = sphi 0, %s100
      %s117 = sphi 0, %s101
      %s123 = sphi 0, %s125
      %s126 = sphi 0, %s123
      %s127 = sphi 0, %s126
      %s143 = sphi 0, %s127
      %s149 = sphi 0, %s151
      %s152 = sphi 0, %s149
      %s153 = sphi 0, %s152
      %s169 = sphi 0, %s153
    $region4: #{tpu_custom_call.1} parent=1 // loop_header_branch
      %27 = sbr.rel (%p25) target = $region8
    $region5: #{tpu_custom_call.1} parent=1 // loop_body
      %s29 = ssub.s32 %s24, 1
      %s30 = ssub.s32 %s24, 2
      %s37 = sadd.s32 1, %s32
      %p38 = scmp.ge.s32.totalorder %s37, 1
      %s39 = scalar_select %p38, 0, %s37
      %s40 = sadd.s32 1, %s31
      %s41 = scalar_select %p38, %s40, %s31
      %p42 = scmp.ge.s32.totalorder %s41, 2
      %s43 = scalar_select %p42, 0, %s41
      %s45 = sadd.s32 %s44, 1
      %p48 = scmp.eq.s32.totalorder %s24, 1
      %p49 = scmp.ne.s32.totalorder %s44, %s46
      %p50 = scmp.eq.s32.totalorder %s24, 0
      %p51 = por %p49, %p50
      %p52 = scmp.ne.s32.totalorder %s44, %s46
      %p53 = scmp.eq.s32.totalorder %s29, 1
      %p54 = por %p52, %p53
      %p55 = scmp.ne.s32.totalorder %s46, %s47
      %p56 = scmp.eq.s32.totalorder %s29, 0
      %p57 = por %p55, %p56
      %p58 = scmp.ne.s32.totalorder %s46, %s47
      %p59 = scmp.eq.s32.totalorder %s30, 1
      %p60 = por %p58, %p59
      %p62 = scmp.ne.s32.totalorder %s47, %s61
      %p63 = scmp.eq.s32.totalorder %s30, 0
      %p64 = por %p62, %p63
      %s65 = ssub.s32 %s31, %s43
      %s66 = ssub.s32 %s32, %s39
      %s67 = sor.u32 %s65, %s66
      %p68 = scmp.eq.s32.totalorder %s67, 0
      %s70 = sadd.s32 %s69, 1
      %s71 = scalar_select %p68, %s69, %s70
      %p74 = pneg %p68
      %p75 = scmp.eq.s32.totalorder %s24, 1
      %p76 = por %p74, %p75
      %p77 = scmp.ne.s32.totalorder %s69, %s72
      %p78 = scmp.eq.s32.totalorder %s24, 0
      %p79 = por %p77, %p78
      %p80 = scmp.ne.s32.totalorder %s69, %s72
      %p81 = scmp.eq.s32.totalorder %s29, 1
      %p82 = por %p80, %p81
      %p83 = scmp.ne.s32.totalorder %s72, %s73
      %p84 = scmp.eq.s32.totalorder %s29, 0
      %p85 = por %p83, %p84
      %p86 = scmp.ne.s32.totalorder %s72, %s73
      %p87 = scmp.eq.s32.totalorder %s30, 1
      %p88 = por %p86, %p87
      %p90 = scmp.ne.s32.totalorder %s73, %s89
      %p91 = scmp.eq.s32.totalorder %s30, 0
      %p92 = por %p90, %p91
      %s93 = ssub.s32 %s31, %s43
      %s94 = ssub.s32 %s32, %s39
      %s95 = sor.u32 %s93, %s94
      %p96 = scmp.eq.s32.totalorder %s95, 0
      %s98 = sadd.s32 %s97, 1
      %s99 = scalar_select %p96, %s97, %s98
      %p102 = pneg %p96
      %p103 = scmp.eq.s32.totalorder %s24, 1
      %p104 = por %p102, %p103
      %p105 = scmp.ne.s32.totalorder %s97, %s100
      %p106 = scmp.eq.s32.totalorder %s24, 0
      %p107 = por %p105, %p106
      %p108 = scmp.ne.s32.totalorder %s97, %s100
      %p109 = scmp.eq.s32.totalorder %s29, 1
      %p110 = por %p108, %p109
      %p111 = scmp.ne.s32.totalorder %s100, %s101
      %p112 = scmp.eq.s32.totalorder %s29, 0
      %p113 = por %p111, %p112
      %p114 = scmp.ne.s32.totalorder %s100, %s101
      %p115 = scmp.eq.s32.totalorder %s30, 1
      %p116 = por %p114, %p115
      %p118 = scmp.ne.s32.totalorder %s101, %s117
      %p119 = scmp.eq.s32.totalorder %s30, 0
      %p120 = por %p118, %p119
      %s121 = ssub.s32 %s31, %s43
      %p122 = scmp.eq.s32.totalorder %s121, 0
      %s124 = sadd.s32 %s123, 1
      %s125 = scalar_select %p122, %s123, %s124
      %p128 = pneg %p122
      %p129 = scmp.eq.s32.totalorder %s24, 1
      %p130 = por %p128, %p129
      %p131 = scmp.ne.s32.totalorder %s123, %s126
      %p132 = scmp.eq.s32.totalorder %s24, 0
      %p133 = por %p131, %p132
      %p134 = scmp.ne.s32.totalorder %s123, %s126
      %p135 = scmp.eq.s32.totalorder %s29, 1
      %p136 = por %p134, %p135
      %p137 = scmp.ne.s32.totalorder %s126, %s127
      %p138 = scmp.eq.s32.totalorder %s29, 0
      %p139 = por %p137, %p138
      %p140 = scmp.ne.s32.totalorder %s126, %s127
      %p141 = scmp.eq.s32.totalorder %s30, 1
      %p142 = por %p140, %p141
      %p144 = scmp.ne.s32.totalorder %s127, %s143
      %p145 = scmp.eq.s32.totalorder %s30, 0
      %p146 = por %p144, %p145
      %s147 = ssub.s32 %s31, %s43
      %p148 = scmp.eq.s32.totalorder %s147, 0
      %s150 = sadd.s32 %s149, 1
      %s151 = scalar_select %p148, %s149, %s150
      %p154 = pneg %p148
      %p155 = scmp.eq.s32.totalorder %s24, 1
      %p156 = por %p154, %p155
      %p157 = scmp.ne.s32.totalorder %s149, %s152
      %p158 = scmp.eq.s32.totalorder %s24, 0
      %p159 = por %p157, %p158
      %p160 = scmp.ne.s32.totalorder %s149, %s152
      %p161 = scmp.eq.s32.totalorder %s29, 1
      %p162 = por %p160, %p161
      %p163 = scmp.ne.s32.totalorder %s152, %s153
      %p164 = scmp.eq.s32.totalorder %s29, 0
      %p165 = por %p163, %p164
      %p166 = scmp.ne.s32.totalorder %s152, %s153
      %p167 = scmp.eq.s32.totalorder %s30, 1
      %p168 = por %p166, %p167
      %p170 = scmp.ne.s32.totalorder %s153, %s169
      %p171 = scmp.eq.s32.totalorder %s30, 0
      %p172 = por %p170, %p171
      %p173 = scmp.le.s32.totalorder 1, %s24
      %p174 = scmp.lt.s32.totalorder %s24, 3
      %p175 = pnand %p173, %p174
      %p176 = pneg %p175
      // Predicated region
      $region9: #{tpu_custom_call.1} parent=5 // pred_check
        _
      $region10: #{tpu_custom_call.1} parent=5 // pred_check_branch
        %178 = sbr.rel (%p175) target = $region12
      $region11: #{tpu_custom_call.1} parent=5 // pred_region
        %s179 = ssub.s32 %s24, 1
        // Predicated region
        $region13: #{tpu_custom_call.1} parent=11 // pred_check
          %p180 = pneg %p57
        $region14: #{tpu_custom_call.1} parent=11 // pred_check_branch
          %182 = sbr.rel (%p180) target = $region16
        $region15: #{tpu_custom_call.1} parent=11 // pred_region
          %184 = vsyncadd [#allocation5], 0
          %s186 = sshll.u32 %s0, 4
          %s187 = int_to_ptr.hbm [resolvable:$true] %s186
          %189 = dma.hbm_to_smem %s187, 16, [#allocation2], [#allocation5]
        $region16: #{tpu_custom_call.1} parent=11 // pred_fallthru
          _
      $region12: #{tpu_custom_call.1} parent=5 // pred_fallthru
        _
      %p190 = scmp.lt.s32.totalorder %s24, 2
      // Predicated region
      $region17: #{tpu_custom_call.1} parent=5 // pred_check
        %p191 = pneg %p190
      $region18: #{tpu_custom_call.1} parent=5 // pred_check_branch
        %193 = sbr.rel (%p191) target = $region20
      $region19: #{tpu_custom_call.1} parent=5 // pred_region
        // Predicated region
        $region21: #{tpu_custom_call.1} parent=19 // pred_check
          %p194 = pneg %p79
        $region22: #{tpu_custom_call.1} parent=19 // pred_check_branch
          %196 = sbr.rel (%p194) target = $region24
        $region23: #{tpu_custom_call.1} parent=19 // pred_region
          %s197 = sand.u32 %s69, 1
          %s198 = scalar_lea.sflag [#allocation3], %s197
          %s199 = sand.u32 %s69, 1
          %s200 = smul.addr %s199, 8
          %s201 = scalar_lea.vmem [#allocation6], %s200
          %203 = vsyncadd %s198, 0
          %s204 = smul.addr %s31, 4
          %s205 = sadd.s32 %s32, %s204
          %s206 = smul.addr %s205, 2
          %s207 = scalar_lea.hbm %s1, %s206
          %s208 = sshll.u32 %s207, 4
          %s209 = int_to_ptr.hbm [resolvable:$true] %s208
          %s210 = sshll.u32 %s201, 4
          %s211 = int_to_ptr.vmem [resolvable:$true] %s210
          %216 = dma.hbm_to_vmem [thread:$0]  %s209, 128, %s211, %s198, 32, 32, 2
        $region24: #{tpu_custom_call.1} parent=19 // pred_fallthru
          _
        // Predicated region
        $region25: #{tpu_custom_call.1} parent=19 // pred_check
          %p217 = pneg %p107
        $region26: #{tpu_custom_call.1} parent=19 // pred_check_branch
          %219 = sbr.rel (%p217) target = $region28
        $region27: #{tpu_custom_call.1} parent=19 // pred_region
          %s220 = sand.u32 %s97, 1
          %s221 = scalar_lea.sflag [#allocation8], %s220
          %s222 = sand.u32 %s97, 1
          %s223 = smul.addr %s222, 2
          %s224 = scalar_lea.vmem [#allocation7], %s223
          %226 = vsyncadd %s221, 0
          %s227 = sadd.s32 %s32, %s31
          %s228 = smul.addr %s227, 2
          %s229 = scalar_lea.hbm %s2, %s228
          %s231 = sshll.u32 %s229, 4
          %s232 = int_to_ptr.hbm [resolvable:$true] %s231
          %s233 = sshll.u32 %s224, 4
          %s234 = int_to_ptr.vmem [resolvable:$true] %s233
          %236 = dma.hbm_to_vmem [thread:$0]  %s232, 32, %s234, %s221
        $region28: #{tpu_custom_call.1} parent=19 // pred_fallthru
          _
      $region20: #{tpu_custom_call.1} parent=5 // pred_fallthru
        _
      %p237 = scmp.le.s32.totalorder 1, %s24
      %p238 = scmp.lt.s32.totalorder %s24, 3
      %p239 = pnand %p237, %p238
      %p240 = pneg %p239
      // Predicated region
      $region29: #{tpu_custom_call.1} parent=5 // pred_check
        _
      $region30: #{tpu_custom_call.1} parent=5 // pred_check_branch
        %242 = sbr.rel (%p239) target = $region32
      $region31: #{tpu_custom_call.1} parent=5 // pred_region
        %s243 = ssub.s32 %s24, 1
        // Predicated region
        $region33: #{tpu_custom_call.1} parent=31 // pred_check
          %p244 = pneg %p57
        $region34: #{tpu_custom_call.1} parent=31 // pred_check_branch
          %246 = sbr.rel (%p244) target = $region36
        $region35: #{tpu_custom_call.1} parent=31 // pred_region
          %248 = dma.done [#allocation5], 16
        $region36: #{tpu_custom_call.1} parent=31 // pred_fallthru
          _
        %s249 = sand.u32 %s72, 1
        %s250 = scalar_lea.sflag [#allocation3], %s249
        %s251 = sand.u32 %s72, 1
        %s252 = smul.addr %s251, 8
        %s253 = scalar_lea.vmem [#allocation6], %s252
        // Predicated region
        $region37: #{tpu_custom_call.1} parent=31 // pred_check
          %p254 = pneg %p85
        $region38: #{tpu_custom_call.1} parent=31 // pred_check_branch
          %256 = sbr.rel (%p254) target = $region40
        $region39: #{tpu_custom_call.1} parent=31 // pred_region
          %258 = dma.done %s250, 128
        $region40: #{tpu_custom_call.1} parent=31 // pred_fallthru
          _
        %s259 = sand.u32 %s100, 1
        %s260 = scalar_lea.sflag [#allocation8], %s259
        %s261 = sand.u32 %s100, 1
        %s262 = smul.addr %s261, 2
        %s263 = scalar_lea.vmem [#allocation7], %s262
        // Predicated region
        $region41: #{tpu_custom_call.1} parent=31 // pred_check
          %p264 = pneg %p113
        $region42: #{tpu_custom_call.1} parent=31 // pred_check_branch
          %266 = sbr.rel (%p264) target = $region44
        $region43: #{tpu_custom_call.1} parent=31 // pred_region
          %268 = dma.done %s260, 32
        $region44: #{tpu_custom_call.1} parent=31 // pred_fallthru
          _
        %269 = sfence
        %p270 = pneg %p57
        %p271 = pneg %p54
        %s272 = sand.u32 %s72, 1
        %s273 = scalar_lea.sflag [#allocation3], %s272
        %s274 = sand.u32 %s72, 1
        %s275 = smul.addr %s274, 8
        %s276 = scalar_lea.vmem [#allocation6], %s275
        %p277 = pneg %p85
        %p278 = pneg %p82
        %s279 = sand.u32 %s100, 1
        %s280 = scalar_lea.sflag [#allocation8], %s279
        %s281 = sand.u32 %s100, 1
        %s282 = smul.addr %s281, 2
        %s283 = scalar_lea.vmem [#allocation7], %s282
        %p284 = pneg %p113
        %p285 = pneg %p110
        %p286 = pneg %p139
        %p287 = pneg %p136
        %s288 = sand.u32 %s126, 1
        %s289 = scalar_lea.sflag [#allocation4], %s288
        %s290 = sand.u32 %s126, 1
        %s291 = smul.addr %s290, 2
        %s292 = scalar_lea.vmem [#allocation9], %s291
        %p293 = pneg %p165
        %p294 = pneg %p162
        %s295 = sand.u32 %s152, 1
        %s296 = scalar_lea.sflag [#allocation11], %s295
        %s297 = sand.u32 %s152, 1
        %s298 = smul.addr %s297, 8
        %s299 = scalar_lea.vmem [#allocation10], %s298
        %p300 = scmp.eq.s32.totalorder %s34, 0
        // Predicated region
        $region45: #{tpu_custom_call.1} parent=31 // pred_check
          %p301 = pneg %p300
        $region46: #{tpu_custom_call.1} parent=31 // pred_check_branch
          %303 = sbr.rel (%p301) target = $region48
        $region47: #{tpu_custom_call.1} parent=31 // pred_region
          %304 = vst [vmem:[%s292] sm:$0x3] 0.0
          %305 = vst [vmem:[%s299] sm:$0x3] 0
          %306 = vst [vmem:[%s299 + $0x2] sm:$0x3] 0
          %307 = vst [vmem:[%s299 + $0x4] sm:$0x3] 0
          %308 = vst [vmem:[%s299 + $0x6] sm:$0x3] 0
        $region48: #{tpu_custom_call.1} parent=31 // pred_fallthru
          _
        %v309 = vld [vmem:[%s263] sm:$0x3]
        %v310 = vld [vmem:[%s253] sm:$0x3]
        %s311 = scalar_lea.vmem %s253, 2 [#allocation6]
        %v312 = vld [vmem:[%s311] sm:$0x3]
        %v313 = vmax.f32 %v310, %v312
        %s314 = scalar_lea.vmem %s253, 4 [#allocation6]
        %v315 = vld [vmem:[%s314] sm:$0x3]
        %v316 = vmax.f32 %v313, %v315
        %s317 = scalar_lea.vmem %s253, 6 [#allocation6]
        %v318 = vld [vmem:[%s317] sm:$0x3]
        %v319 = vmax.f32 %v316, %v318
        %v320 = vsub.f32 %v310, %v319
        %v321 = vmul.f32 %v320, 1.442695
        %v322 = vpow.pop %v321
        %v323 = vadd.f32 %v322, 0.0
        %vm324 = vcmp.eq.s32.totalorder %v309, 0
        %v325 = vsel %vm324, %v310, 0.0
        %s326 = sld [smem:[#allocation2]]
        %v327 = vstv %s326
        %v328 = vsel %vm324, %v327, 0.0
        %v329 = vld [vmem:[%s299] sm:$0x3]
        %v330 = vsel %vm324, 1, 0
        %v331 = vadd.s32 %v329, %v330
        %332 = vst [vmem:[%s299] sm:$0x3] %v331
        %v333 = vld [vmem:[%s311] sm:$0x3]
        %v334 = vsub.f32 %v333, %v319
        %v335 = vmul.f32 %v334, 1.442695
        %v336 = vpow.pop %v335
        %v337 = vadd.f32 %v323, %v336
        %vm338 = vcmp.eq.s32.totalorder %v309, 1
        %v339 = vsel %vm338, %v333, %v325
        %s340 = sld [smem:[#allocation2 + $0x1]]
        %v341 = vstv %s340
        %v342 = vsel %vm338, %v341, %v328
        %s343 = scalar_lea.vmem %s299, 2 [#allocation10]
        %v344 = vld [vmem:[%s343] sm:$0x3]
        %v345 = vsel %vm338, 1, 0
        %v346 = vadd.s32 %v344, %v345
        %347 = vst [vmem:[%s343] sm:$0x3] %v346
        %v348 = vld [vmem:[%s314] sm:$0x3]
        %v349 = vsub.f32 %v348, %v319
        %v350 = vmul.f32 %v349, 1.442695
        %v351 = vpow.pop %v350
        %v352 = vadd.f32 %v337, %v351
        %vm353 = vcmp.eq.s32.totalorder %v309, 2
        %v354 = vsel %vm353, %v348, %v339
        %s355 = sld [smem:[#allocation2 + $0x2]]
        %v356 = vstv %s355
        %v357 = vsel %vm353, %v356, %v342
        %s358 = scalar_lea.vmem %s299, 4 [#allocation10]
        %v359 = vld [vmem:[%s358] sm:$0x3]
        %v360 = vsel %vm353, 1, 0
        %v361 = vadd.s32 %v359, %v360
        %362 = vst [vmem:[%s358] sm:$0x3] %v361
        %v363 = vld [vmem:[%s317] sm:$0x3]
        %v364 = vsub.f32 %v363, %v319
        %v365 = vmul.f32 %v364, 1.442695
        %v366 = vpow.pop %v365
        %v367 = vadd.f32 %v352, %v366
        %vm368 = vcmp.eq.s32.totalorder %v309, 3
        %v369 = vsel %vm368, %v363, %v354
        %s370 = sld [smem:[#allocation2 + $0x3]]
        %v371 = vstv %s370
        %v372 = vsel %vm368, %v371, %v357
        %s373 = scalar_lea.vmem %s299, 6 [#allocation10]
        %v374 = vld [vmem:[%s373] sm:$0x3]
        %v375 = vsel %vm368, 1, 0
        %v376 = vadd.s32 %v374, %v375
        %377 = vst [vmem:[%s373] sm:$0x3] %v376
        %v378 = vlog2.pop %v367
        %v379 = vmul.f32 %v378, 0.6931472
        %v380 = vadd.f32 %v379, %v319
        %v381 = vsub.f32 %v380, %v369
        %v382 = vmul.f32 %v372, %v381
        %v383 = vld [vmem:[%s292] sm:$0x3]
        %v384 = vadd.f32 %v383, %v382
        %385 = vst [vmem:[%s292] sm:$0x3] %v384
        %s386 = sand.u32 %s126, 1
        %s387 = scalar_lea.sflag [#allocation4], %s386
        %s388 = sand.u32 %s126, 1
        %s389 = smul.addr %s388, 2
        %s390 = scalar_lea.vmem [#allocation9], %s389
        %s391 = sand.u32 %s152, 1
        %s392 = scalar_lea.sflag [#allocation11], %s391
        %s393 = sand.u32 %s152, 1
        %s394 = smul.addr %s393, 8
        %s395 = scalar_lea.vmem [#allocation10], %s394
        // Predicated region
        $region49: #{tpu_custom_call.1} parent=31 // pred_check
          %p396 = pneg %p136
        $region50: #{tpu_custom_call.1} parent=31 // pred_check_branch
          %398 = sbr.rel (%p396) target = $region52
        $region51: #{tpu_custom_call.1} parent=31 // pred_region
          %400 = vsyncadd %s387, 0
          %s401 = smul.addr %s33, 2
          %s402 = scalar_lea.hbm %s3, %s401
          %s404 = sshll.u32 %s390, 4
          %s405 = int_to_ptr.vmem [resolvable:$true] %s404
          %s406 = sshll.u32 %s402, 4
          %s407 = int_to_ptr.hbm [resolvable:$true] %s406
          %409 = dma.vmem_to_hbm [thread:$0]  %s405, 32, %s407, %s387
        $region52: #{tpu_custom_call.1} parent=31 // pred_fallthru
          _
        // Predicated region
        $region53: #{tpu_custom_call.1} parent=31 // pred_check
          %p410 = pneg %p162
        $region54: #{tpu_custom_call.1} parent=31 // pred_check_branch
          %412 = sbr.rel (%p410) target = $region56
        $region55: #{tpu_custom_call.1} parent=31 // pred_region
          %414 = vsyncadd %s392, 0
          %s415 = smul.addr %s33, 4
          %s416 = smul.addr %s415, 2
          %s417 = scalar_lea.hbm %s4, %s416
          %s418 = sshll.u32 %s395, 4
          %s419 = int_to_ptr.vmem [resolvable:$true] %s418
          %s420 = sshll.u32 %s417, 4
          %s421 = int_to_ptr.hbm [resolvable:$true] %s420
          %426 = dma.vmem_to_hbm [thread:$0]  %s419, 128, %s421, %s392, 32, 32, 2
        $region56: #{tpu_custom_call.1} parent=31 // pred_fallthru
          _
      $region32: #{tpu_custom_call.1} parent=5 // pred_fallthru
        _
      %p427 = scmp.le.s32.totalorder 2, %s24
      // Predicated region
      $region57: #{tpu_custom_call.1} parent=5 // pred_check
        %p428 = pneg %p427
      $region58: #{tpu_custom_call.1} parent=5 // pred_check_branch
        %430 = sbr.rel (%p428) target = $region60
      $region59: #{tpu_custom_call.1} parent=5 // pred_region
        %s431 = ssub.s32 %s24, 2
        // Predicated region
        $region61: #{tpu_custom_call.1} parent=59 // pred_check
          %p432 = pneg %p142
        $region62: #{tpu_custom_call.1} parent=59 // pred_check_branch
          %434 = sbr.rel (%p432) target = $region64
        $region63: #{tpu_custom_call.1} parent=59 // pred_region
          %s435 = sand.u32 %s127, 1
          %s436 = scalar_lea.sflag [#allocation4], %s435
          %s437 = sand.u32 %s127, 1
          %s438 = smul.addr %s437, 2
          %s439 = scalar_lea.vmem [#allocation9], %s438
          %441 = dma.done %s436, 32
        $region64: #{tpu_custom_call.1} parent=59 // pred_fallthru
          _
        // Predicated region
        $region65: #{tpu_custom_call.1} parent=59 // pred_check
          %p442 = pneg %p168
        $region66: #{tpu_custom_call.1} parent=59 // pred_check_branch
          %444 = sbr.rel (%p442) target = $region68
        $region67: #{tpu_custom_call.1} parent=59 // pred_region
          %s445 = sand.u32 %s153, 1
          %s446 = scalar_lea.sflag [#allocation11], %s445
          %s447 = sand.u32 %s153, 1
          %s448 = smul.addr %s447, 8
          %s449 = scalar_lea.vmem [#allocation10], %s448
          %451 = dma.done %s446, 128
        $region68: #{tpu_custom_call.1} parent=59 // pred_fallthru
          _
      $region60: #{tpu_custom_call.1} parent=5 // pred_fallthru
        _
    $region6: #{tpu_custom_call.1} parent=1 // loop_footer
      %s28 = sadd.s32 1, %s24
    $region7: #{tpu_custom_call.1} parent=1 // loop_footer_branch
      %23 = sbr.rel target = $region3
    $region8: #{tpu_custom_call.1} parent=1 // loop_exit
      _
    %452 = vsyncpa [#allocation3], 1
    %s453 = scalar_lea.sflag [#allocation3], 1
    %454 = vsyncpa %s453, 1
    %455 = vsyncpa [#allocation8], 1
    %s456 = scalar_lea.sflag [#allocation8], 1
    %457 = vsyncpa %s456, 1
    %458 = vsyncpa [#allocation4], 1
    %s459 = scalar_lea.sflag [#allocation4], 1
    %460 = vsyncpa %s459, 1
    %461 = vsyncpa [#allocation11], 1
    %s462 = scalar_lea.sflag [#allocation11], 1
    %463 = vsyncpa %s462, 1
    %464 = vsyncpa [#allocation5], 1
    %s465 = scalar_lea.sflag [#allocation5], 1
    %466 = vsyncpa %s465, 1

</llo_original>
